<compile_context>
chip_gen: v7x
topology: tpu7x:2x2x1
jax: 0.10.0
libtpu: 0.0.40
codegen_flags: <defaults>
</compile_context>

<pallas_src>
import jax
import jax.numpy as jnp
from jax import lax
from jax.experimental import pallas as pl
from jax.experimental.pallas import tpu as pltpu


# ----------------------------- helpers ------------------------------------- #

def _softplus(x):
    # softplus(x) = max(x, 0) + log(1 + exp(-|x|))
    return jnp.maximum(x, 0.0) + jnp.log(1.0 + jnp.exp(-jnp.abs(x)))


def _compiler_params(*semantics):
    # Explicit VMEM budget: 48 MiB leaves headroom under v7x's 64 MiB physical VMEM
    # and raises the 16/32 MiB default scoped limits on v5e/v6e.
    return pltpu.CompilerParams(
        dimension_semantics=tuple(semantics),
        vmem_limit_bytes=48 * 1024 * 1024,
    )


# ----------------------------- encoder ------------------------------------- #

def encoder_kernel(x_ref, w1_ref, b1_ref, w2_ref, b2_ref, wls_ref, bls_ref,
                   gamma_ref, bbeta_ref, conc_ref, rate_ref, h_acc):
    """Inference net, tiled over the vocab reduction axis.

    h = tanh(x @ W1 + b1) accumulated in f32 VMEM scratch across vocab tiles;
    BN + softplus heads run as an epilogue on the last grid step (full batch kept
    inside one invocation so BatchNorm batch statistics stay exact).
    """
    i = pl.program_id(0)

    @pl.when(i == 0)
    def _init():
        h_acc[...] = jnp.zeros_like(h_acc)

    # Stream the big [V, H] weight: bf16 MXU operands, f32 accumulation.
    h_acc[...] += jnp.dot(x_ref[...].astype(jnp.bfloat16),
                          w1_ref[...].astype(jnp.bfloat16),
                          preferred_element_type=jnp.float32)

    @pl.when(i == pl.num_programs(0) - 1)
    def _epilogue():
        h = jnp.tanh(h_acc[...] + b1_ref[...])              # dropout: eval-mode identity
        loc = jnp.dot(h, w2_ref[...],
                      preferred_element_type=jnp.float32) + b2_ref[...]      # [B, K]
        # BatchNorm1d with batch statistics (training mode), eps = 1e-5
        mean = jnp.mean(loc, axis=0, keepdims=True)
        var = jnp.mean((loc - mean) ** 2, axis=0, keepdims=True)
        bn = (loc - mean) * lax.rsqrt(var + 1e-5) * gamma_ref[...] + bbeta_ref[...]
        conc_ref[...] = _softplus(bn)                       # concentration [B, K]
        ls = jnp.dot(h, wls_ref[...],
                     preferred_element_type=jnp.float32) + bls_ref[...]
        rate_ref[...] = 1.0 + _softplus(ls)                 # rate [B, K]


def encoder_forward(params, doc_bow, tv):
    B, V = doc_bow.shape
    H = params["w_mlp"].shape[1]
    K = params["w_loc"].shape[1]
    nv = V // tv
    const = lambda i: (0, 0)
    conc, rate = pl.pallas_call(
        encoder_kernel,
        grid=(nv,),
        in_specs=[
            pl.BlockSpec((B, tv), lambda i: (0, i)),        # doc_bow tile
            pl.BlockSpec((tv, H), lambda i: (i, 0)),        # W1 tile (streamed)
            pl.BlockSpec((1, H), const),                    # b1
            pl.BlockSpec((H, K), const),                    # W_loc
            pl.BlockSpec((1, K), const),                    # b_loc
            pl.BlockSpec((H, K), const),                    # W_logscale
            pl.BlockSpec((1, K), const),                    # b_logscale
            pl.BlockSpec((1, K), const),                    # bn gamma
            pl.BlockSpec((1, K), const),                    # bn beta
        ],
        out_specs=[pl.BlockSpec((B, K), const), pl.BlockSpec((B, K), const)],
        out_shape=[jax.ShapeDtypeStruct((B, K), jnp.float32),
                   jax.ShapeDtypeStruct((B, K), jnp.float32)],
        scratch_shapes=[pltpu.VMEM((B, H), jnp.float32)],
        compiler_params=_compiler_params("arbitrary"),
    )(doc_bow, params["w_mlp"], params["b_mlp"], params["w_loc"], params["b_loc"],
      params["w_ls"], params["b_ls"], params["bn_gamma"], params["bn_beta"])
    return conc, rate


# ----------------------------- generative ---------------------------------- #

def make_generative_kernel(tv, cache_wt):
    """Generative model + SD, tiled over the vocabulary with a 2-pass softmax.

    Grid (2, V//TV): pass 0 builds per-topic online logsumexp stats (max / sum-exp
    scratch) over vocab tiles; pass 1 emits normalized beta tiles, accumulates the
    reconstruction term -<log(theta@beta), bow>, and finalizes theta / Re / SD.

    If cache_wt: the pre-softmax logits wt [K, V] are stashed in a VMEM scratch
    during pass 0 and re-read in pass 1 (no duplicate matmul / HBM sweep).
    """

    def kernel(alpha_ref, bprior_ref, topic_ref, wemb_ref, doc_ref,
               theta_ref, beta_ref, re_ref, sd_ref,
               theta_s, m_s, l_s, re_s, *cache):
        p = pl.program_id(0)     # pass index
        v = pl.program_id(1)     # vocab tile index
        nv = pl.num_programs(1)

        @pl.when(jnp.logical_and(p == 0, v == 0))
        def _init():
            alpha = alpha_ref[...]                          # [B, K]
            ea = jnp.exp(alpha - jnp.max(alpha, axis=-1, keepdims=True))
            theta_s[...] = ea * pl.reciprocal(jnp.sum(ea, axis=-1, keepdims=True),
                                              approx=True)  # softmax over topics
            m_s[...] = jnp.full_like(m_s, -jnp.inf)
            l_s[...] = jnp.zeros_like(l_s)
            re_s[...] = jnp.zeros_like(re_s)

        def compute_wt():
            # bf16 MXU operands, f32 accumulation.
            return jnp.dot(topic_ref[...].astype(jnp.bfloat16),
                           wemb_ref[...].astype(jnp.bfloat16),
                           preferred_element_type=jnp.float32)   # [K, TV]

        def update_stats(wt):
            m_old = m_s[...]
            m_new = jnp.maximum(m_old, jnp.max(wt, axis=-1, keepdims=True))
            l_s[...] = (l_s[...] * jnp.exp(m_old - m_new)
                        + jnp.sum(jnp.exp(wt - m_new), axis=-1, keepdims=True))
            m_s[...] = m_new

        def emit(wt):
            inv_l = pl.reciprocal(l_s[...], approx=True)    # EUP slot, frees VALU
            beta_t = jnp.exp(wt - m_s[...]) * inv_l         # softmax over vocab, [K, TV]
            beta_ref[...] = beta_t
            px = jnp.dot(theta_s[...], beta_t,
                         preferred_element_type=jnp.float32)  # [B, TV]
            px = jnp.maximum(px, 1e-30)                     # guard log(0) underflow
            re_s[...] += jnp.sum(jnp.log(px) * doc_ref[...], axis=-1, keepdims=True)

        if cache_wt:
            wt_cache = cache[0]
            off = pl.multiple_of(v * tv, tv)                # lane-aligned dynamic offset

            @pl.when(p == 0)
            def _pass0():
                wt = compute_wt()
                wt_cache[:, pl.ds(off, tv)] = wt
                update_stats(wt)

            @pl.when(p == 1)
            def _pass1():
                emit(wt_cache[:, pl.ds(off, tv)])
        else:
            wt = compute_wt()                               # recompute path (big V)

            @pl.when(p == 0)
            def _pass0():
                update_stats(wt)

            @pl.when(p == 1)
            def _pass1():
                emit(wt)

        @pl.when(jnp.logical_and(p == 1, v == nv - 1))
        def _finalize():
            theta_ref[...] = theta_s[...]
            re_ref[...] = -re_s[...]                        # Re = -<log px, bow>
            d = alpha_ref[...] - bprior_ref[...]            # Sinkhorn(single points)
            sd_ref[...] = 0.5 * jnp.sum(d * d, axis=-1, keepdims=True)

    return kernel


def generative_forward(params, alpha, beta_prior, doc_bow, tv):
    B, V = doc_bow.shape
    K, E = params["topic_emb"].shape
    nv = V // tv
    # Cache the [K, V] pre-softmax logits in VMEM when they fit comfortably under the
    # 48 MiB budget (leaves room for tiles + double buffering); otherwise recompute.
    cache_wt = (K * V * 4) <= (12 * 1024 * 1024)
    const = lambda p, v: (0, 0)
    # With the cache, pass 1 does not need word-embedding tiles: hold block 0.
    wemb_map = (lambda p, v: (0, v * (1 - p))) if cache_wt else (lambda p, v: (0, v))

    scratch = [pltpu.VMEM((B, K), jnp.float32),             # theta
               pltpu.VMEM((K, 1), jnp.float32),             # running max
               pltpu.VMEM((K, 1), jnp.float32),             # running sum-exp
               pltpu.VMEM((B, 1), jnp.float32)]             # Re accumulator
    if cache_wt:
        scratch.append(pltpu.VMEM((K, V), jnp.float32))     # logits cache

    theta, beta, re, sd = pl.pallas_call(
        make_generative_kernel(tv, cache_wt),
        grid=(2, nv),
        in_specs=[
            pl.BlockSpec((B, K), const),                        # alpha
            pl.BlockSpec((B, K), const),                        # LogNormal prior sample
            pl.BlockSpec((K, E), const),                        # topic embeddings
            pl.BlockSpec((E, tv), wemb_map),                    # word-embedding tile
            pl.BlockSpec((B, tv), lambda p, v: (0, v * p)),     # doc tile (streamed pass 1)
        ],
        out_specs=[
            pl.BlockSpec((B, K), const),                        # theta
            pl.BlockSpec((K, tv), lambda p, v: (0, v * p)),     # beta tiles (pass 1)
            pl.BlockSpec((B, 1), const),                        # Re
            pl.BlockSpec((B, 1), const),                        # SD
        ],
        out_shape=[jax.ShapeDtypeStruct((B, K), jnp.float32),
                   jax.ShapeDtypeStruct((K, V), jnp.float32),
                   jax.ShapeDtypeStruct((B, 1), jnp.float32),
                   jax.ShapeDtypeStruct((B, 1), jnp.float32)],
        scratch_shapes=scratch,
        compiler_params=_compiler_params("arbitrary", "arbitrary"),
    )(alpha, beta_prior, params["topic_emb"], params["word_emb"], doc_bow)
    return theta, beta, re[:, 0], sd[:, 0]


# ----------------------------- STDR ----------------------------------------- #

def stdr_kernel(s_ref, out_ref, sq_acc, g_acc):
    """STDR = (1/K^2) * sum_{i,j} 0.5*||s_i - s_j||^2, tiled over vocab.

    Uses sum_{i,j}<s_i,s_j> = ||sum_i s_i||^2 so no KxK Gram / MXU contraction is needed:
    STDR = (K*sum_i||s_i||^2 - ||sum_i s_i||^2) / K^2, both terms separable per column.
    """
    i = pl.program_id(0)

    @pl.when(i == 0)
    def _init():
        sq_acc[...] = jnp.zeros_like(sq_acc)
        g_acc[...] = jnp.zeros_like(g_acc)

    s = s_ref[...]                                          # [K, TV]
    sq_acc[...] += jnp.sum(s * s, keepdims=True)            # [1, 1]
    col = jnp.sum(s, axis=0, keepdims=True)                 # [1, TV]
    g_acc[...] += jnp.sum(col * col, keepdims=True)         # [1, 1]

    @pl.when(i == pl.num_programs(0) - 1)
    def _finalize():
        k = float(s_ref.shape[0])
        out_ref[...] = (k * sq_acc[...] - g_acc[...]) / (k * k)


def stdr_forward(sparse_topics, tv):
    K, V = sparse_topics.shape
    nv = V // tv
    out = pl.pallas_call(
        stdr_kernel,
        grid=(nv,),
        in_specs=[pl.BlockSpec((K, tv), lambda i: (0, i))],
        out_specs=pl.BlockSpec((1, 1), lambda i: (0, 0)),
        out_shape=jax.ShapeDtypeStruct((1, 1), jnp.float32),
        scratch_shapes=[pltpu.VMEM((1, 1), jnp.float32),
                        pltpu.VMEM((1, 1), jnp.float32)],
        compiler_params=_compiler_params("arbitrary"),
    )(sparse_topics)
    return out[0, 0]


# ----------------------------- full forward --------------------------------- #

def astm_forward(params, doc_bow, key, *, coel, coea, topk, v_tile=512):
    B, V = doc_bow.shape
    K = params["topic_emb"].shape[0]
    # Vocab tile: multiple of 128 lanes; fall back to untiled if it doesn't divide V.
    tv = v_tile if (v_tile is not None and V % v_tile == 0) else V

    # ---- Inference network (Pallas) ----
    conc, rate = encoder_forward(params, doc_bow, tv)

    # Gamma rsample + LogNormal prior (stochastic glue)
    k1, k2 = jax.random.split(key)
    alpha = jax.random.gamma(k1, conc) / rate                               # Gamma(conc, rate)
    beta_prior = jnp.exp(jax.random.normal(k2, (B, K), dtype=jnp.float32))  # LogNormal(0, 1)

    # ---- Generative model + SD (Pallas) ----
    theta, beta, re, sd = generative_forward(params, alpha, beta_prior, doc_bow, tv)

    # Exact top-k filter + per-topic renormalization (glue; scatter, no one_hot blow-up)
    vals, idxs = lax.top_k(beta, topk)                                      # [K, topk]
    rows = jnp.arange(K, dtype=jnp.int32)[:, None]
    filtered = jnp.zeros_like(beta).at[rows, idxs].set(vals)
    sparse_topics = filtered / jnp.sum(filtered, axis=-1, keepdims=True)

    # STDR regularizer (Pallas)
    stdr = stdr_forward(sparse_topics, tv)

    loss = re + coel * sd - coea * stdr
    return loss, re, sd, stdr, theta


def init_params(key, *, vocab, hidden, n_topics, emb):
    ks = jax.random.split(key, 4)
    # Linear weights passed pre-transposed as [in, out]
    w_mlp = jax.random.normal(ks[0], (vocab, hidden), jnp.float32) * (1.0 / jnp.sqrt(vocab))
    b_mlp = jnp.zeros((1, hidden), jnp.float32)
    w_loc = jax.random.normal(ks[1], (hidden, n_topics), jnp.float32) * (1.0 / jnp.sqrt(hidden))
    b_loc = jnp.zeros((1, n_topics), jnp.float32)
    w_ls = jnp.zeros((hidden, n_topics), jnp.float32)           # log_scale zero-init
    b_ls = jnp.zeros((1, n_topics), jnp.float32)
    bn_gamma = jnp.ones((1, n_topics), jnp.float32)
    bn_beta = jnp.zeros((1, n_topics), jnp.float32)
    # orthogonal-ish topic embeddings: [K, E]
    q, _ = jnp.linalg.qr(jax.random.normal(ks[2], (emb, n_topics), jnp.float32))
    topic_emb = q.T.astype(jnp.float32)                          # [K, E]
    word_emb = jax.random.normal(ks[3], (emb, vocab), jnp.float32) * (1.0 / jnp.sqrt(emb))
    return dict(w_mlp=w_mlp, b_mlp=b_mlp, w_loc=w_loc, b_loc=b_loc,
                w_ls=w_ls, b_ls=b_ls, bn_gamma=bn_gamma, bn_beta=bn_beta,
                topic_emb=topic_emb, word_emb=word_emb)


if __name__ == "__main__":
    B, V, H, K, E, TOPK = 8, 256, 64, 16, 32, 10
    COEL, COEA = 1.0, 1.0

    root = jax.random.PRNGKey(0)
    k_param, k_data, k_sample = jax.random.split(root, 3)

    params = init_params(k_param, vocab=V, hidden=H, n_topics=K, emb=E)
    # synthetic bag-of-words counts
    doc_bow = jax.random.poisson(k_data, 0.5, (B, V)).astype(jnp.float32)

    # v_tile=128 exercises the multi-tile / accumulator / logits-cache path at this
    # small vocab; production sizes would use the 512 default.
    loss, re, sd, stdr, theta = astm_forward(
        params, doc_bow, k_sample, coel=COEL, coea=COEA, topk=TOPK, v_tile=128)
    jax.block_until_ready((loss, re, sd, stdr, theta))

    assert loss.shape == (B,) and re.shape == (B,) and sd.shape == (B,)
    assert theta.shape == (B, K) and stdr.shape == ()
    assert bool(jnp.all(jnp.isfinite(loss)))
    assert bool(jnp.all(theta >= 0.0))
    # TODO(synk): dropout is eval-mode identity; Gamma/LogNormal sampling and the
    # exact top_k selection stay in plain JAX glue.
    print("KERNEL_OK")
</pallas_src>

<mosaic_0001>
module attributes {stable_mosaic.version = 11 : i64} {
  func.func @encoder_kernel(%arg0: i32, %arg1: memref<8x128xf32, #tpu.memory_space<vmem>>, %arg2: memref<128x64xf32, #tpu.memory_space<vmem>>, %arg3: memref<1x64xf32, #tpu.memory_space<vmem>>, %arg4: memref<64x16xf32, #tpu.memory_space<vmem>>, %arg5: memref<1x16xf32, #tpu.memory_space<vmem>>, %arg6: memref<64x16xf32, #tpu.memory_space<vmem>>, %arg7: memref<1x16xf32, #tpu.memory_space<vmem>>, %arg8: memref<1x16xf32, #tpu.memory_space<vmem>>, %arg9: memref<1x16xf32, #tpu.memory_space<vmem>>, %arg10: memref<8x16xf32, #tpu.memory_space<vmem>>, %arg11: memref<8x16xf32, #tpu.memory_space<vmem>>, %arg12: memref<8x64xf32, #tpu.memory_space<vmem>>) attributes {dimension_semantics = [#tpu.dimension_semantics<arbitrary>], iteration_bounds = array<i64: 2>, scalar_prefetch = 0 : i64, scratch_operands = 1 : i64, tpu.core_type = #tpu.core_type<tc>, window_params = [{transform_indices = @transform_0, window_bounds = array<i64: 8, 128>}, {transform_indices = @transform_1, window_bounds = array<i64: 128, 64>}, {pipeline_mode = #tpu.pipeline_mode<synchronous>, transform_indices = @transform_2, window_bounds = array<i64: 1, 64>}, {pipeline_mode = #tpu.pipeline_mode<synchronous>, transform_indices = @transform_3, window_bounds = array<i64: 64, 16>}, {pipeline_mode = #tpu.pipeline_mode<synchronous>, transform_indices = @transform_4, window_bounds = array<i64: 1, 16>}, {pipeline_mode = #tpu.pipeline_mode<synchronous>, transform_indices = @transform_5, window_bounds = array<i64: 64, 16>}, {pipeline_mode = #tpu.pipeline_mode<synchronous>, transform_indices = @transform_6, window_bounds = array<i64: 1, 16>}, {pipeline_mode = #tpu.pipeline_mode<synchronous>, transform_indices = @transform_7, window_bounds = array<i64: 1, 16>}, {pipeline_mode = #tpu.pipeline_mode<synchronous>, transform_indices = @transform_8, window_bounds = array<i64: 1, 16>}, {pipeline_mode = #tpu.pipeline_mode<synchronous>, transform_indices = @transform_9, window_bounds = array<i64: 8, 16>}, {pipeline_mode = #tpu.pipeline_mode<synchronous>, transform_indices = @transform_10, window_bounds = array<i64: 8, 16>}]} {
    %c0_i32 = arith.constant 0 : i32
    %0 = arith.cmpi eq, %arg0, %c0_i32 : i32
    %1 = arith.extui %0 : i1 to i32
    %c0_i32_0 = arith.constant 0 : i32
    %2 = arith.cmpi ne, %1, %c0_i32_0 : i32
    scf.if %2 {
      %cst_9 = arith.constant 0.000000e+00 : f32
      %14 = vector.broadcast %cst_9 : f32 to vector<8x64xf32>
      %c0_10 = arith.constant 0 : index
      %c0_11 = arith.constant 0 : index
      %15 = vector.load %arg12[%c0_10, %c0_11] : memref<8x64xf32, #tpu.memory_space<vmem>>, vector<8x64xf32>
      tpu.vector_store %arg12[%c0_10, %c0_11], %14 {strides = array<i32>} : memref<8x64xf32, #tpu.memory_space<vmem>>, vector<8x64xf32>,
    } else {
    }
    %c0 = arith.constant 0 : index
    %c0_1 = arith.constant 0 : index
    %3 = vector.load %arg12[%c0, %c0_1] : memref<8x64xf32, #tpu.memory_space<vmem>>, vector<8x64xf32>
    %c0_2 = arith.constant 0 : index
    %c0_3 = arith.constant 0 : index
    %4 = vector.load %arg1[%c0_2, %c0_3] : memref<8x128xf32, #tpu.memory_space<vmem>>, vector<8x128xf32>
    %5 = arith.truncf %4 : vector<8x128xf32> to vector<8x128xbf16>
    %c0_4 = arith.constant 0 : index
    %c0_5 = arith.constant 0 : index
    %6 = vector.load %arg2[%c0_4, %c0_5] : memref<128x64xf32, #tpu.memory_space<vmem>>, vector<128x64xf32>
    %7 = arith.truncf %6 : vector<128x64xf32> to vector<128x64xbf16>
    %cst = arith.constant dense<0.000000e+00> : vector<8x64xf32>
    %8 = tpu.matmul %5, %7, %cst {dimension_numbers = #tpu.dot_dimension_numbers<[1], [0], [0], [1], [0, 0, 1, 1], [], []>} : vector<8x128xbf16>, vector<128x64xbf16>, vector<8x64xf32> -> vector<8x64xf32>
    %9 = arith.addf %3, %8 : vector<8x64xf32>
    %c0_6 = arith.constant 0 : index
    %c0_7 = arith.constant 0 : index
    %10 = vector.load %arg12[%c0_6, %c0_7] : memref<8x64xf32, #tpu.memory_space<vmem>>, vector<8x64xf32>
    tpu.vector_store %arg12[%c0_6, %c0_7], %9 {strides = array<i32>} : memref<8x64xf32, #tpu.memory_space<vmem>>, vector<8x64xf32>,
    %c1_i32 = arith.constant 1 : i32
    %11 = arith.cmpi eq, %arg0, %c1_i32 : i32
    %12 = arith.extui %11 : i1 to i32
    %c0_i32_8 = arith.constant 0 : i32
    %13 = arith.cmpi ne, %12, %c0_i32_8 : i32
    scf.if %13 {
      %c0_9 = arith.constant 0 : index
      %c0_10 = arith.constant 0 : index
      %14 = vector.load %arg12[%c0_9, %c0_10] : memref<8x64xf32, #tpu.memory_space<vmem>>, vector<8x64xf32>
      %c0_11 = arith.constant 0 : index
      %c0_12 = arith.constant 0 : index
      %15 = vector.load %arg3[%c0_11, %c0_12] : memref<1x64xf32, #tpu.memory_space<vmem>>, vector<1x64xf32>
      %16 = vector.broadcast %15 : vector<1x64xf32> to vector<8x64xf32>
      %17 = arith.addf %14, %16 : vector<8x64xf32>
      %18 = math.tanh %17 : vector<8x64xf32>
      %c0_13 = arith.constant 0 : index
      %c0_14 = arith.constant 0 : index
      %19 = vector.load %arg4[%c0_13, %c0_14] : memref<64x16xf32, #tpu.memory_space<vmem>>, vector<64x16xf32>
      %cst_15 = arith.constant dense<0.000000e+00> : vector<8x16xf32>
      %20 = tpu.matmul %18, %19, %cst_15 {dimension_numbers = #tpu.dot_dimension_numbers<[1], [0], [0], [1], [0, 0, 1, 1], [], []>} : vector<8x64xf32>, vector<64x16xf32>, vector<8x16xf32> -> vector<8x16xf32>
      %c0_16 = arith.constant 0 : index
      %c0_17 = arith.constant 0 : index
      %21 = vector.load %arg5[%c0_16, %c0_17] : memref<1x16xf32, #tpu.memory_space<vmem>>, vector<1x16xf32>
      %22 = vector.broadcast %21 : vector<1x16xf32> to vector<8x16xf32>
      %23 = arith.addf %20, %22 : vector<8x16xf32>
      %cst_18 = arith.constant dense<0.000000e+00> : vector<16xf32>
      %24 = vector.multi_reduction <add>, %23, %cst_18 [0] : vector<8x16xf32> to vector<16xf32>
      %25 = vector.shape_cast %24 : vector<16xf32> to vector<1x16xf32>
      %cst_19 = arith.constant 8.000000e+00 : f32
      %26 = vector.broadcast %cst_19 : f32 to vector<1x16xf32>
      %27 = arith.divf %25, %26 : vector<1x16xf32>
      %28 = vector.broadcast %27 : vector<1x16xf32> to vector<8x16xf32>
      %29 = arith.subf %23, %28 : vector<8x16xf32>
      %30 = arith.mulf %29, %29 : vector<8x16xf32>
      %cst_20 = arith.constant dense<0.000000e+00> : vector<16xf32>
      %31 = vector.multi_reduction <add>, %30, %cst_20 [0] : vector<8x16xf32> to vector<16xf32>
      %32 = vector.shape_cast %31 : vector<16xf32> to vector<1x16xf32>
      %cst_21 = arith.constant 8.000000e+00 : f32
      %33 = vector.broadcast %cst_21 : f32 to vector<1x16xf32>
      %34 = arith.divf %32, %33 : vector<1x16xf32>
      %35 = vector.broadcast %27 : vector<1x16xf32> to vector<8x16xf32>
      %36 = arith.subf %23, %35 : vector<8x16xf32>
      %cst_22 = arith.constant 9.99999974E-6 : f32
      %37 = vector.broadcast %cst_22 : f32 to vector<1x16xf32>
      %38 = arith.addf %34, %37 : vector<1x16xf32>
      %39 = math.rsqrt %38 : vector<1x16xf32>
      %40 = vector.broadcast %39 : vector<1x16xf32> to vector<8x16xf32>
      %41 = arith.mulf %36, %40 : vector<8x16xf32>
      %c0_23 = arith.constant 0 : index
      %c0_24 = arith.constant 0 : index
      %42 = vector.load %arg8[%c0_23, %c0_24] : memref<1x16xf32, #tpu.memory_space<vmem>>, vector<1x16xf32>
      %43 = vector.broadcast %42 : vector<1x16xf32> to vector<8x16xf32>
      %44 = arith.mulf %41, %43 : vector<8x16xf32>
      %c0_25 = arith.constant 0 : index
      %c0_26 = arith.constant 0 : index
      %45 = vector.load %arg9[%c0_25, %c0_26] : memref<1x16xf32, #tpu.memory_space<vmem>>, vector<1x16xf32>
      %46 = vector.broadcast %45 : vector<1x16xf32> to vector<8x16xf32>
      %47 = arith.addf %44, %46 : vector<8x16xf32>
      %cst_27 = arith.constant 0.000000e+00 : f32
      %48 = vector.broadcast %cst_27 : f32 to vector<8x16xf32>
      %49 = arith.maximumf %47, %48 : vector<8x16xf32>
      %50 = math.absf %47 : vector<8x16xf32>
      %cst_28 = arith.constant 0.000000e+00 : f32
      %51 = vector.broadcast %cst_28 : f32 to vector<8x16xf32>
      %52 = arith.subf %51, %50 : vector<8x16xf32>
      %53 = math.exp %52 : vector<8x16xf32>
      %cst_29 = arith.constant 1.000000e+00 : f32
      %54 = vector.broadcast %cst_29 : f32 to vector<8x16xf32>
      %55 = arith.addf %54, %53 : vector<8x16xf32>
      %56 = math.log %55 : vector<8x16xf32>
      %57 = arith.addf %49, %56 : vector<8x16xf32>
      %c0_30 = arith.constant 0 : index
      %c0_31 = arith.constant 0 : index
      %58 = vector.load %arg10[%c0_30, %c0_31] : memref<8x16xf32, #tpu.memory_space<vmem>>, vector<8x16xf32>
      tpu.vector_store %arg10[%c0_30, %c0_31], %57 {strides = array<i32>} : memref<8x16xf32, #tpu.memory_space<vmem>>, vector<8x16xf32>,
      %c0_32 = arith.constant 0 : index
      %c0_33 = arith.constant 0 : index
      %59 = vector.load %arg6[%c0_32, %c0_33] : memref<64x16xf32, #tpu.memory_space<vmem>>, vector<64x16xf32>
      %cst_34 = arith.constant dense<0.000000e+00> : vector<8x16xf32>
      %60 = tpu.matmul %18, %59, %cst_34 {dimension_numbers = #tpu.dot_dimension_numbers<[1], [0], [0], [1], [0, 0, 1, 1], [], []>} : vector<8x64xf32>, vector<64x16xf32>, vector<8x16xf32> -> vector<8x16xf32>
      %c0_35 = arith.constant 0 : index
      %c0_36 = arith.constant 0 : index
      %61 = vector.load %arg7[%c0_35, %c0_36] : memref<1x16xf32, #tpu.memory_space<vmem>>, vector<1x16xf32>
      %62 = vector.broadcast %61 : vector<1x16xf32> to vector<8x16xf32>
      %63 = arith.addf %60, %62 : vector<8x16xf32>
      %cst_37 = arith.constant 0.000000e+00 : f32
      %64 = vector.broadcast %cst_37 : f32 to vector<8x16xf32>
      %65 = arith.maximumf %63, %64 : vector<8x16xf32>
      %66 = math.absf %63 : vector<8x16xf32>
      %cst_38 = arith.constant 0.000000e+00 : f32
      %67 = vector.broadcast %cst_38 : f32 to vector<8x16xf32>
      %68 = arith.subf %67, %66 : vector<8x16xf32>
      %69 = math.exp %68 : vector<8x16xf32>
      %cst_39 = arith.constant 1.000000e+00 : f32
      %70 = vector.broadcast %cst_39 : f32 to vector<8x16xf32>
      %71 = arith.addf %70, %69 : vector<8x16xf32>
      %72 = math.log %71 : vector<8x16xf32>
      %73 = arith.addf %65, %72 : vector<8x16xf32>
      %cst_40 = arith.constant 1.000000e+00 : f32
      %74 = vector.broadcast %cst_40 : f32 to vector<8x16xf32>
      %75 = arith.addf %74, %73 : vector<8x16xf32>
      %c0_41 = arith.constant 0 : index
      %c0_42 = arith.constant 0 : index
      %76 = vector.load %arg11[%c0_41, %c0_42] : memref<8x16xf32, #tpu.memory_space<vmem>>, vector<8x16xf32>
      tpu.vector_store %arg11[%c0_41, %c0_42], %75 {strides = array<i32>} : memref<8x16xf32, #tpu.memory_space<vmem>>, vector<8x16xf32>,
    } else {
    }
    return
  }
  func.func @transform_0(%arg0: i32) -> (i32, i32) {
    %c0_i32 = arith.constant 0 : i32
    %c0_i32_0 = arith.constant 0 : i32
    return %c0_i32, %arg0 : i32, i32
  }
  func.func @transform_1(%arg0: i32) -> (i32, i32) {
    %c0_i32 = arith.constant 0 : i32
    %c0_i32_0 = arith.constant 0 : i32
    return %arg0, %c0_i32 : i32, i32
  }
  func.func @transform_2(%arg0: i32) -> (i32, i32) {
    %c0_i32 = arith.constant 0 : i32
    %c0_i32_0 = arith.constant 0 : i32
    %c0_i32_1 = arith.constant 0 : i32
    return %c0_i32, %c0_i32_0 : i32, i32
  }
  func.func @transform_3(%arg0: i32) -> (i32, i32) {
    %c0_i32 = arith.constant 0 : i32
    %c0_i32_0 = arith.constant 0 : i32
    %c0_i32_1 = arith.constant 0 : i32
    return %c0_i32, %c0_i32_0 : i32, i32
  }
  func.func @transform_4(%arg0: i32) -> (i32, i32) {
    %c0_i32 = arith.constant 0 : i32
    %c0_i32_0 = arith.constant 0 : i32
    %c0_i32_1 = arith.constant 0 : i32
    return %c0_i32, %c0_i32_0 : i32, i32
  }
  func.func @transform_5(%arg0: i32) -> (i32, i32) {
    %c0_i32 = arith.constant 0 : i32
    %c0_i32_0 = arith.constant 0 : i32
    %c0_i32_1 = arith.constant 0 : i32
    return %c0_i32, %c0_i32_0 : i32, i32
  }
  func.func @transform_6(%arg0: i32) -> (i32, i32) {
    %c0_i32 = arith.constant 0 : i32
    %c0_i32_0 = arith.constant 0 : i32
    %c0_i32_1 = arith.constant 0 : i32
    return %c0_i32, %c0_i32_0 : i32, i32
  }
  func.func @transform_7(%arg0: i32) -> (i32, i32) {
    %c0_i32 = arith.constant 0 : i32
    %c0_i32_0 = arith.constant 0 : i32
    %c0_i32_1 = arith.constant 0 : i32
    return %c0_i32, %c0_i32_0 : i32, i32
  }
  func.func @transform_8(%arg0: i32) -> (i32, i32) {
    %c0_i32 = arith.constant 0 : i32
    %c0_i32_0 = arith.constant 0 : i32
    %c0_i32_1 = arith.constant 0 : i32
    return %c0_i32, %c0_i32_0 : i32, i32
  }
  func.func @transform_9(%arg0: i32) -> (i32, i32) {
    %c0_i32 = arith.constant 0 : i32
    %c0_i32_0 = arith.constant 0 : i32
    %c0_i32_1 = arith.constant 0 : i32
    return %c0_i32, %c0_i32_0 : i32, i32
  }
  func.func @transform_10(%arg0: i32) -> (i32, i32) {
    %c0_i32 = arith.constant 0 : i32
    %c0_i32_0 = arith.constant 0 : i32
    %c0_i32_1 = arith.constant 0 : i32
    return %c0_i32, %c0_i32_0 : i32, i32
  }
}

</mosaic_0001>

<llo_original>
// kernel: tpu_custom_call.1
$region0: #{tpu_custom_call.1}
  #allocation0 [shape = 'u32[]', space=smem, size = 0x4, offset = 0x4, fixed_abs, tag = 'smem constant byte address 0x4 - core index']
  #allocation1 [shape = 'u32[144,128]{1,0:T(1,128)}', space=vmem, size = 0x12000, scoped, tag = 'internal scratch']
  #allocation2 [shape = 'f32[8,64]{1,0:T(8,128)}', space=vmem, size = 0x1000, scoped, tag = 'scratch operand']
  %s0 = inlined_call_operand.vmem [shape: f32[8,256], index: 0, kind: input, shape index: {}]
  %s1 = inlined_call_operand.vmem [shape: f32[256,64], index: 1, kind: input, shape index: {}]
  %s2 = inlined_call_operand.vmem [shape: f32[1,64], index: 2, kind: input, shape index: {}]
  %s3 = inlined_call_operand.vmem [shape: f32[64,16], index: 3, kind: input, shape index: {}]
  %s4 = inlined_call_operand.vmem [shape: f32[1,16], index: 4, kind: input, shape index: {}]
  %s5 = inlined_call_operand.vmem [shape: f32[64,16], index: 5, kind: input, shape index: {}]
  %s6 = inlined_call_operand.vmem [shape: f32[1,16], index: 6, kind: input, shape index: {}]
  %s7 = inlined_call_operand.vmem [shape: f32[1,16], index: 7, kind: input, shape index: {}]
  %s8 = inlined_call_operand.vmem [shape: f32[1,16], index: 8, kind: input, shape index: {}]
  %s9 = inlined_call_operand.hbm [shape: f32[8,16], index: 9, kind: output, shape index: {0}]
  %s10 = inlined_call_operand.hbm [shape: f32[8,16], index: 10, kind: output, shape index: {1}]
  %11 = xla_tuple %s9, %s10
  %s12 = sld [smem:[#allocation0]]
  $region85: #{tpu_custom_call.1} parent=0
    _
  %s14 = ssub.s32 1, %s12
  %s15 = scalar_select 0, %s14, %s12
  $region1: #{tpu_custom_call.1} parent=0
    #allocation3 [shape = 'u8[4096]{0}', space=vmem, size = 0x1000, scoped, tag = 'output window, operand 0, single buffered']
    #allocation4 [shape = 's32[2]{0}', space=sflag, size = 0x8, scoped, tag = 'scoped memory for tpu_custom_call.1']
    #allocation5 [shape = 'u8[4096]{0}', space=vmem, size = 0x1000, scoped, tag = 'output window, operand 1, single buffered']
    #allocation6 [shape = 's32[1]{0}', space=sflag, size = 0x4, scoped, tag = 'scoped memory for tpu_custom_call.1']
    %16 = vsyncpa [#allocation4], 0
    %17 = vsyncpa [#allocation6], 0
    loop: start=0, step=1, limit=4
    $region2: #{tpu_custom_call.1} parent=1 // loop_pre_header
      _
    $region3: #{tpu_custom_call.1} parent=1 // loop_header
      %s19 = sphi 0, %s23
      %p20 = scmp.ge.s32.totalorder %s19, 4
      %s29 = sphi 0, %s31
      %s32 = sphi 0, %s29
      %s33 = sphi 0, %s32
      %s49 = sphi 0, %s33
      %s55 = sphi 0, %s57
      %s58 = sphi 0, %s55
      %s59 = sphi 0, %s58
      %s75 = sphi 0, %s59
      %s79 = sphi 0, %s79
      %s81 = sphi 0, %s79
      %s82 = sphi 0, %s81
      %s96 = sphi 0, %s82
      %s100 = sphi 0, %s100
      %s102 = sphi 0, %s100
      %s103 = sphi 0, %s102
      %s117 = sphi 0, %s103
      %s121 = sphi 0, %s121
      %s123 = sphi 0, %s121
      %s124 = sphi 0, %s123
      %s138 = sphi 0, %s124
      %s142 = sphi 0, %s142
      %s144 = sphi 0, %s142
      %s145 = sphi 0, %s144
      %s159 = sphi 0, %s145
      %s163 = sphi 0, %s163
      %s165 = sphi 0, %s163
      %s166 = sphi 0, %s165
      %s180 = sphi 0, %s166
      %s184 = sphi 0, %s184
      %s186 = sphi 0, %s184
      %s187 = sphi 0, %s186
      %s201 = sphi 0, %s187
      %s205 = sphi 0, %s205
      %s207 = sphi 0, %s205
      %s208 = sphi 0, %s207
      %s222 = sphi 0, %s208
      %s226 = sphi 0, %s226
      %s228 = sphi 0, %s226
      %s229 = sphi 0, %s228
      %s243 = sphi 0, %s229
      %s247 = sphi 0, %s247
      %s249 = sphi 0, %s247
      %s250 = sphi 0, %s249
      %s264 = sphi 0, %s250
    $region4: #{tpu_custom_call.1} parent=1 // loop_header_branch
      %22 = sbr.rel (%p20) target = $region8
    $region5: #{tpu_custom_call.1} parent=1 // loop_body
      %s24 = ssub.s32 %s19, 1
      %s25 = ssub.s32 %s19, 2
      %s26 = sadd.s32 %s19, 1
      %s27 = ssub.s32 %s19, %s26
      %p28 = scmp.eq.s32.totalorder %s27, 0
      %s30 = sadd.s32 %s29, 1
      %s31 = scalar_select %p28, %s29, %s30
      %p34 = pneg %p28
      %p35 = scmp.eq.s32.totalorder %s19, 1
      %p36 = por %p34, %p35
      %p37 = scmp.ne.s32.totalorder %s29, %s32
      %p38 = scmp.eq.s32.totalorder %s19, 0
      %p39 = por %p37, %p38
      %p40 = scmp.ne.s32.totalorder %s29, %s32
      %p41 = scmp.eq.s32.totalorder %s24, 1
      %p42 = por %p40, %p41
      %p43 = scmp.ne.s32.totalorder %s32, %s33
      %p44 = scmp.eq.s32.totalorder %s24, 0
      %p45 = por %p43, %p44
      %p46 = scmp.ne.s32.totalorder %s32, %s33
      %p47 = scmp.eq.s32.totalorder %s25, 1
      %p48 = por %p46, %p47
      %p50 = scmp.ne.s32.totalorder %s33, %s49
      %p51 = scmp.eq.s32.totalorder %s25, 0
      %p52 = por %p50, %p51
      %s53 = ssub.s32 %s19, %s26
      %p54 = scmp.eq.s32.totalorder %s53, 0
      %s56 = sadd.s32 %s55, 1
      %s57 = scalar_select %p54, %s55, %s56
      %p60 = pneg %p54
      %p61 = scmp.eq.s32.totalorder %s19, 1
      %p62 = por %p60, %p61
      %p63 = scmp.ne.s32.totalorder %s55, %s58
      %p64 = scmp.eq.s32.totalorder %s19, 0
      %p65 = por %p63, %p64
      %p66 = scmp.ne.s32.totalorder %s55, %s58
      %p67 = scmp.eq.s32.totalorder %s24, 1
      %p68 = por %p66, %p67
      %p69 = scmp.ne.s32.totalorder %s58, %s59
      %p70 = scmp.eq.s32.totalorder %s24, 0
      %p71 = por %p69, %p70
      %p72 = scmp.ne.s32.totalorder %s58, %s59
      %p73 = scmp.eq.s32.totalorder %s25, 1
      %p74 = por %p72, %p73
      %p76 = scmp.ne.s32.totalorder %s59, %s75
      %p77 = scmp.eq.s32.totalorder %s25, 0
      %p78 = por %p76, %p77
      %s80 = sadd.s32 %s79, 1
      %p83 = scmp.eq.s32.totalorder %s19, 1
      %p84 = scmp.ne.s32.totalorder %s79, %s81
      %p85 = scmp.eq.s32.totalorder %s19, 0
      %p86 = por %p84, %p85
      %p87 = scmp.ne.s32.totalorder %s79, %s81
      %p88 = scmp.eq.s32.totalorder %s24, 1
      %p89 = por %p87, %p88
      %p90 = scmp.ne.s32.totalorder %s81, %s82
      %p91 = scmp.eq.s32.totalorder %s24, 0
      %p92 = por %p90, %p91
      %p93 = scmp.ne.s32.totalorder %s81, %s82
      %p94 = scmp.eq.s32.totalorder %s25, 1
      %p95 = por %p93, %p94
      %p97 = scmp.ne.s32.totalorder %s82, %s96
      %p98 = scmp.eq.s32.totalorder %s25, 0
      %p99 = por %p97, %p98
      %s101 = sadd.s32 %s100, 1
      %p104 = scmp.eq.s32.totalorder %s19, 1
      %p105 = scmp.ne.s32.totalorder %s100, %s102
      %p106 = scmp.eq.s32.totalorder %s19, 0
      %p107 = por %p105, %p106
      %p108 = scmp.ne.s32.totalorder %s100, %s102
      %p109 = scmp.eq.s32.totalorder %s24, 1
      %p110 = por %p108, %p109
      %p111 = scmp.ne.s32.totalorder %s102, %s103
      %p112 = scmp.eq.s32.totalorder %s24, 0
      %p113 = por %p111, %p112
      %p114 = scmp.ne.s32.totalorder %s102, %s103
      %p115 = scmp.eq.s32.totalorder %s25, 1
      %p116 = por %p114, %p115
      %p118 = scmp.ne.s32.totalorder %s103, %s117
      %p119 = scmp.eq.s32.totalorder %s25, 0
      %p120 = por %p118, %p119
      %s122 = sadd.s32 %s121, 1
      %p125 = scmp.eq.s32.totalorder %s19, 1
      %p126 = scmp.ne.s32.totalorder %s121, %s123
      %p127 = scmp.eq.s32.totalorder %s19, 0
      %p128 = por %p126, %p127
      %p129 = scmp.ne.s32.totalorder %s121, %s123
      %p130 = scmp.eq.s32.totalorder %s24, 1
      %p131 = por %p129, %p130
      %p132 = scmp.ne.s32.totalorder %s123, %s124
      %p133 = scmp.eq.s32.totalorder %s24, 0
      %p134 = por %p132, %p133
      %p135 = scmp.ne.s32.totalorder %s123, %s124
      %p136 = scmp.eq.s32.totalorder %s25, 1
      %p137 = por %p135, %p136
      %p139 = scmp.ne.s32.totalorder %s124, %s138
      %p140 = scmp.eq.s32.totalorder %s25, 0
      %p141 = por %p139, %p140
      %s143 = sadd.s32 %s142, 1
      %p146 = scmp.eq.s32.totalorder %s19, 1
      %p147 = scmp.ne.s32.totalorder %s142, %s144
      %p148 = scmp.eq.s32.totalorder %s19, 0
      %p149 = por %p147, %p148
      %p150 = scmp.ne.s32.totalorder %s142, %s144
      %p151 = scmp.eq.s32.totalorder %s24, 1
      %p152 = por %p150, %p151
      %p153 = scmp.ne.s32.totalorder %s144, %s145
      %p154 = scmp.eq.s32.totalorder %s24, 0
      %p155 = por %p153, %p154
      %p156 = scmp.ne.s32.totalorder %s144, %s145
      %p157 = scmp.eq.s32.totalorder %s25, 1
      %p158 = por %p156, %p157
      %p160 = scmp.ne.s32.totalorder %s145, %s159
      %p161 = scmp.eq.s32.totalorder %s25, 0
      %p162 = por %p160, %p161
      %s164 = sadd.s32 %s163, 1
      %p167 = scmp.eq.s32.totalorder %s19, 1
      %p168 = scmp.ne.s32.totalorder %s163, %s165
      %p169 = scmp.eq.s32.totalorder %s19, 0
      %p170 = por %p168, %p169
      %p171 = scmp.ne.s32.totalorder %s163, %s165
      %p172 = scmp.eq.s32.totalorder %s24, 1
      %p173 = por %p171, %p172
      %p174 = scmp.ne.s32.totalorder %s165, %s166
      %p175 = scmp.eq.s32.totalorder %s24, 0
      %p176 = por %p174, %p175
      %p177 = scmp.ne.s32.totalorder %s165, %s166
      %p178 = scmp.eq.s32.totalorder %s25, 1
      %p179 = por %p177, %p178
      %p181 = scmp.ne.s32.totalorder %s166, %s180
      %p182 = scmp.eq.s32.totalorder %s25, 0
      %p183 = por %p181, %p182
      %s185 = sadd.s32 %s184, 1
      %p188 = scmp.eq.s32.totalorder %s19, 1
      %p189 = scmp.ne.s32.totalorder %s184, %s186
      %p190 = scmp.eq.s32.totalorder %s19, 0
      %p191 = por %p189, %p190
      %p192 = scmp.ne.s32.totalorder %s184, %s186
      %p193 = scmp.eq.s32.totalorder %s24, 1
      %p194 = por %p192, %p193
      %p195 = scmp.ne.s32.totalorder %s186, %s187
      %p196 = scmp.eq.s32.totalorder %s24, 0
      %p197 = por %p195, %p196
      %p198 = scmp.ne.s32.totalorder %s186, %s187
      %p199 = scmp.eq.s32.totalorder %s25, 1
      %p200 = por %p198, %p199
      %p202 = scmp.ne.s32.totalorder %s187, %s201
      %p203 = scmp.eq.s32.totalorder %s25, 0
      %p204 = por %p202, %p203
      %s206 = sadd.s32 %s205, 1
      %p209 = scmp.eq.s32.totalorder %s19, 1
      %p210 = scmp.ne.s32.totalorder %s205, %s207
      %p211 = scmp.eq.s32.totalorder %s19, 0
      %p212 = por %p210, %p211
      %p213 = scmp.ne.s32.totalorder %s205, %s207
      %p214 = scmp.eq.s32.totalorder %s24, 1
      %p215 = por %p213, %p214
      %p216 = scmp.ne.s32.totalorder %s207, %s208
      %p217 = scmp.eq.s32.totalorder %s24, 0
      %p218 = por %p216, %p217
      %p219 = scmp.ne.s32.totalorder %s207, %s208
      %p220 = scmp.eq.s32.totalorder %s25, 1
      %p221 = por %p219, %p220
      %p223 = scmp.ne.s32.totalorder %s208, %s222
      %p224 = scmp.eq.s32.totalorder %s25, 0
      %p225 = por %p223, %p224
      %s227 = sadd.s32 %s226, 1
      %p230 = scmp.eq.s32.totalorder %s19, 1
      %p231 = scmp.ne.s32.totalorder %s226, %s228
      %p232 = scmp.eq.s32.totalorder %s19, 0
      %p233 = por %p231, %p232
      %p234 = scmp.ne.s32.totalorder %s226, %s228
      %p235 = scmp.eq.s32.totalorder %s24, 1
      %p236 = por %p234, %p235
      %p237 = scmp.ne.s32.totalorder %s228, %s229
      %p238 = scmp.eq.s32.totalorder %s24, 0
      %p239 = por %p237, %p238
      %p240 = scmp.ne.s32.totalorder %s228, %s229
      %p241 = scmp.eq.s32.totalorder %s25, 1
      %p242 = por %p240, %p241
      %p244 = scmp.ne.s32.totalorder %s229, %s243
      %p245 = scmp.eq.s32.totalorder %s25, 0
      %p246 = por %p244, %p245
      %s248 = sadd.s32 %s247, 1
      %p251 = scmp.eq.s32.totalorder %s19, 1
      %p252 = scmp.ne.s32.totalorder %s247, %s249
      %p253 = scmp.eq.s32.totalorder %s19, 0
      %p254 = por %p252, %p253
      %p255 = scmp.ne.s32.totalorder %s247, %s249
      %p256 = scmp.eq.s32.totalorder %s24, 1
      %p257 = por %p255, %p256
      %p258 = scmp.ne.s32.totalorder %s249, %s250
      %p259 = scmp.eq.s32.totalorder %s24, 0
      %p260 = por %p258, %p259
      %p261 = scmp.ne.s32.totalorder %s249, %s250
      %p262 = scmp.eq.s32.totalorder %s25, 1
      %p263 = por %p261, %p262
      %p265 = scmp.ne.s32.totalorder %s250, %s264
      %p266 = scmp.eq.s32.totalorder %s25, 0
      %p267 = por %p265, %p266
      %p268 = scmp.le.s32.totalorder 1, %s19
      %p269 = scmp.lt.s32.totalorder %s19, 3
      %p270 = pnand %p268, %p269
      %p271 = pneg %p270
      // Predicated region
      $region9: #{tpu_custom_call.1} parent=5 // pred_check
        _
      $region10: #{tpu_custom_call.1} parent=5 // pred_check_branch
        %273 = sbr.rel (%p270) target = $region12
      $region11: #{tpu_custom_call.1} parent=5 // pred_region
        %s274 = ssub.s32 %s19, 1
        // Predicated region
        $region13: #{tpu_custom_call.1} parent=11 // pred_check
          %p275 = pneg %p92
        $region14: #{tpu_custom_call.1} parent=11 // pred_check_branch
          %277 = sbr.rel (%p275) target = $region16
        $region15: #{tpu_custom_call.1} parent=11 // pred_region
          _
        $region16: #{tpu_custom_call.1} parent=11 // pred_fallthru
          _
        // Predicated region
        $region17: #{tpu_custom_call.1} parent=11 // pred_check
          %p278 = pneg %p113
        $region18: #{tpu_custom_call.1} parent=11 // pred_check_branch
          %280 = sbr.rel (%p278) target = $region20
        $region19: #{tpu_custom_call.1} parent=11 // pred_region
          _
        $region20: #{tpu_custom_call.1} parent=11 // pred_fallthru
          _
        // Predicated region
        $region21: #{tpu_custom_call.1} parent=11 // pred_check
          %p281 = pneg %p134
        $region22: #{tpu_custom_call.1} parent=11 // pred_check_branch
          %283 = sbr.rel (%p281) target = $region24
        $region23: #{tpu_custom_call.1} parent=11 // pred_region
          _
        $region24: #{tpu_custom_call.1} parent=11 // pred_fallthru
          _
        // Predicated region
        $region25: #{tpu_custom_call.1} parent=11 // pred_check
          %p284 = pneg %p155
        $region26: #{tpu_custom_call.1} parent=11 // pred_check_branch
          %286 = sbr.rel (%p284) target = $region28
        $region27: #{tpu_custom_call.1} parent=11 // pred_region
          _
        $region28: #{tpu_custom_call.1} parent=11 // pred_fallthru
          _
        // Predicated region
        $region29: #{tpu_custom_call.1} parent=11 // pred_check
          %p287 = pneg %p176
        $region30: #{tpu_custom_call.1} parent=11 // pred_check_branch
          %289 = sbr.rel (%p287) target = $region32
        $region31: #{tpu_custom_call.1} parent=11 // pred_region
          _
        $region32: #{tpu_custom_call.1} parent=11 // pred_fallthru
          _
        // Predicated region
        $region33: #{tpu_custom_call.1} parent=11 // pred_check
          %p290 = pneg %p197
        $region34: #{tpu_custom_call.1} parent=11 // pred_check_branch
          %292 = sbr.rel (%p290) target = $region36
        $region35: #{tpu_custom_call.1} parent=11 // pred_region
          _
        $region36: #{tpu_custom_call.1} parent=11 // pred_fallthru
          _
        // Predicated region
        $region37: #{tpu_custom_call.1} parent=11 // pred_check
          %p293 = pneg %p218
        $region38: #{tpu_custom_call.1} parent=11 // pred_check_branch
          %295 = sbr.rel (%p293) target = $region40
        $region39: #{tpu_custom_call.1} parent=11 // pred_region
          _
        $region40: #{tpu_custom_call.1} parent=11 // pred_fallthru
          _
      $region12: #{tpu_custom_call.1} parent=5 // pred_fallthru
        _
      %p296 = scmp.lt.s32.totalorder %s19, 2
      // Predicated region
      $region41: #{tpu_custom_call.1} parent=5 // pred_check
        %p297 = pneg %p296
      $region42: #{tpu_custom_call.1} parent=5 // pred_check_branch
        %299 = sbr.rel (%p297) target = $region44
      $region43: #{tpu_custom_call.1} parent=5 // pred_region
        // Predicated region
        $region45: #{tpu_custom_call.1} parent=43 // pred_check
          %p300 = pneg %p39
        $region46: #{tpu_custom_call.1} parent=43 // pred_check_branch
          %302 = sbr.rel (%p300) target = $region48
        $region47: #{tpu_custom_call.1} parent=43 // pred_region
          %p303 = scmp.lt.s32.totalorder %s19, 1
          %s304 = scalar_select %p303, %s19, 1
          %s305 = smul.addr %s304, 8
          %s306 = scalar_lea.vmem %s0, %s305
        $region48: #{tpu_custom_call.1} parent=43 // pred_fallthru
          _
        // Predicated region
        $region49: #{tpu_custom_call.1} parent=43 // pred_check
          %p307 = pneg %p65
        $region50: #{tpu_custom_call.1} parent=43 // pred_check_branch
          %309 = sbr.rel (%p307) target = $region52
        $region51: #{tpu_custom_call.1} parent=43 // pred_region
          %s310 = smul.u32 16, %s19
          %p311 = scmp.lt.s32.totalorder %s310, 31
          %s312 = scalar_select %p311, %s310, 31
          %s313 = smul.addr %s312, 8
          %s314 = scalar_lea.vmem %s1, %s313
          %s315 = smul.u32 16, %s19
        $region52: #{tpu_custom_call.1} parent=43 // pred_fallthru
          _
      $region44: #{tpu_custom_call.1} parent=5 // pred_fallthru
        _
      %p316 = scmp.le.s32.totalorder 1, %s19
      %p317 = scmp.lt.s32.totalorder %s19, 3
      %p318 = pnand %p316, %p317
      %p319 = pneg %p318
      // Predicated region
      $region53: #{tpu_custom_call.1} parent=5 // pred_check
        _
      $region54: #{tpu_custom_call.1} parent=5 // pred_check_branch
        %321 = sbr.rel (%p318) target = $region56
      $region55: #{tpu_custom_call.1} parent=5 // pred_region
        %s322 = ssub.s32 %s19, 1
        %p323 = scmp.lt.s32.totalorder %s24, 1
        %s324 = scalar_select %p323, %s24, 1
        %s325 = smul.addr %s324, 8
        %s326 = scalar_lea.vmem %s0, %s325
        %p327 = pneg %p45
        %p328 = pneg %p42
        %s329 = smul.u32 16, %s24
        %p330 = scmp.lt.s32.totalorder %s329, 31
        %s331 = scalar_select %p330, %s329, 31
        %s332 = smul.addr %s331, 8
        %s333 = scalar_lea.vmem %s1, %s332
        %p334 = pneg %p71
        %p335 = pneg %p68
        %p336 = pneg %p92
        %p337 = pneg %p89
        %p338 = pneg %p113
        %p339 = pneg %p110
        %p340 = pneg %p134
        %p341 = pneg %p131
        %p342 = pneg %p155
        %p343 = pneg %p152
        %p344 = pneg %p176
        %p345 = pneg %p173
        %p346 = pneg %p197
        %p347 = pneg %p194
        %p348 = pneg %p218
        %p349 = pneg %p215
        %p350 = pneg %p239
        %p351 = pneg %p236
        %p352 = pneg %p260
        %p353 = pneg %p257
        %p354 = scmp.lt.s32.totalorder %s24, 1
        %s355 = scalar_select %p354, %s24, 1
        %s356 = smul.addr %s355, 8
        %s357 = scalar_lea.vmem %s0, %s356
        %s358 = smul.u32 16, %s24
        %p359 = scmp.lt.s32.totalorder %s358, 31
        %s360 = scalar_select %p359, %s358, 31
        %s361 = smul.addr %s360, 8
        %s362 = scalar_lea.vmem %s1, %s361
        %s363 = smul.u32 16, %s24
        %p365 = scmp.eq.s32.totalorder %s24, 0
        // Predicated region
        $region57: #{tpu_custom_call.1} parent=55 // pred_check
          %p366 = pneg %p365
        $region58: #{tpu_custom_call.1} parent=55 // pred_check_branch
          %368 = sbr.rel (%p366) target = $region60
        $region59: #{tpu_custom_call.1} parent=55 // pred_region
          %vm369 = vcmask 523264
          %370 = vst.msk [vmem:[#allocation2] sm:$0xff] %vm369, 0.0
        $region60: #{tpu_custom_call.1} parent=55 // pred_fallthru
          _
        %v371 = vld [vmem:[#allocation2] sm:$0xff]
        %v372 = vld [vmem:[%s357] sm:$0xff]
        %v373 = vpack.c.bf16 %v372, %v372
        %v374 = vld [vmem:[%s362] sm:$0xff]
        %v375 = vld [vmem:[%s362 + $0x8] sm:$0xff]
        %v376 = vld [vmem:[%s362 + $0x10] sm:$0xff]
        %v377 = vld [vmem:[%s362 + $0x18] sm:$0xff]
        %v378 = vld [vmem:[%s362 + $0x20] sm:$0xff]
        %v379 = vld [vmem:[%s362 + $0x28] sm:$0xff]
        %v380 = vld [vmem:[%s362 + $0x30] sm:$0xff]
        %v381 = vld [vmem:[%s362 + $0x38] sm:$0xff]
        %v382 = vld [vmem:[%s362 + $0x40] sm:$0xff]
        %v383 = vld [vmem:[%s362 + $0x48] sm:$0xff]
        %v384 = vld [vmem:[%s362 + $0x50] sm:$0xff]
        %v385 = vld [vmem:[%s362 + $0x58] sm:$0xff]
        %v386 = vld [vmem:[%s362 + $0x60] sm:$0xff]
        %v387 = vld [vmem:[%s362 + $0x68] sm:$0xff]
        %v388 = vld [vmem:[%s362 + $0x70] sm:$0xff]
        %v389 = vld [vmem:[%s362 + $0x78] sm:$0xff]
        %v390 = vpack.c.bf16 %v375, %v374
        %v391 = vpack.c.bf16 %v377, %v376
        %v392 = vpack.c.bf16 %v379, %v378
        %v393 = vpack.c.bf16 %v381, %v380
        %v394 = vpack.c.bf16 %v383, %v382
        %v395 = vpack.c.bf16 %v385, %v384
        %v396 = vpack.c.bf16 %v387, %v386
        %v397 = vpack.c.bf16 %v389, %v388
        %398 = vmatprep.subr.bf16.mxu0 0
        %399 = vmatpush1.bf16.msra.mxu0 %v390
        %400 = vmatprep.subr.bf16.mxu0 0
        %401 = vmatpush1.bf16.msra.mxu0 %v391
        %402 = vmatprep.subr.bf16.mxu0 0
        %403 = vmatpush1.bf16.msra.mxu0 %v392
        %404 = vmatprep.subr.bf16.mxu0 0
        %405 = vmatpush1.bf16.msra.mxu0 %v393
        %406 = vmatprep.subr.bf16.mxu0 0
        %407 = vmatpush1.bf16.msra.mxu0 %v394
        %408 = vmatprep.subr.bf16.mxu0 0
        %409 = vmatpush1.bf16.msra.mxu0 %v395
        %410 = vmatprep.subr.bf16.mxu0 0
        %411 = vmatpush1.bf16.msra.mxu0 %v396
        %412 = vmatprep.subr.bf16.mxu0 0
        %413 = vmatpush1.bf16.msra.mxu0 %v397
        %414 = vmatprep.subr.bf16.mxu0 0
        %415 = vmatpush1.bf16.msra.mxu0 0
        %416 = vmatprep.subr.bf16.mxu0 0
        %417 = vmatpush1.bf16.msra.mxu0 0
        %418 = vmatprep.subr.bf16.mxu0 0
        %419 = vmatpush1.bf16.msra.mxu0 0
        %420 = vmatprep.subr.bf16.mxu0 0
        %421 = vmatpush1.bf16.msra.mxu0 0
        %422 = vmatprep.subr.bf16.mxu0 0
        %423 = vmatpush1.bf16.msra.mxu0 0
        %424 = vmatprep.subr.bf16.mxu0 0
        %425 = vmatpush1.bf16.msra.mxu0 0
        %426 = vmatprep.subr.bf16.mxu0 0
        %427 = vmatpush1.bf16.msra.mxu0 0
        %428 = vmatprep.subr.bf16.mxu0 0
        %429 = vmatpush1.bf16.msra.mxu0 0
        %430 = vmatprep.mubr.bf16.mxu0 0
        %431 = vmatmul.mubr.bf16.gmra.mrb[0].mxu0 %v373
        %v432 = vpop.f32.mrb[0].mxu0
        %v433 = vadd.f32 0.0, %v432
        %v434 = vpop.f32.mrb[0].mxu0
        %v435 = vpop.f32.mrb[0].mxu0
        %v436 = vpop.f32.mrb[0].mxu0
        %437 = vdwg.mxu0
        %v438 = vadd.f32 %v371, %v433
        %vm439 = vcmask 523264
        %440 = vst.msk [vmem:[#allocation2] sm:$0xff] %vm439, %v438
        %p441 = scmp.eq.s32.totalorder %s24, 1
        // Predicated region
        $region61: #{tpu_custom_call.1} parent=55 // pred_check
          %p442 = pneg %p441
        $region62: #{tpu_custom_call.1} parent=55 // pred_check_branch
          %444 = sbr.rel (%p442) target = $region64
        $region63: #{tpu_custom_call.1} parent=55 // pred_region
          %v445 = vld [vmem:[#allocation2] sm:$0xff]
          %v446 = vld [vmem:[%s2] sm:$0x1]
          %v448 = vlaneseq
          %v449 = vshrl.u32 %v448, 7
          %v450 = vsub.s32 0, %v449
          %v451 = vrot.slane %v446, %v450
          %v453 = vadd.f32 %v445, %v451
          %v454 = vtanh.pop %v453
          %v455 = vld [vmem:[%s3] sm:$0xff]
          %v456 = vld [vmem:[%s3 + $0x8] sm:$0xff]
          %v457 = vld [vmem:[%s3 + $0x10] sm:$0xff]
          %v458 = vld [vmem:[%s3 + $0x18] sm:$0xff]
          %v459 = vld [vmem:[%s3 + $0x20] sm:$0xff]
          %v460 = vld [vmem:[%s3 + $0x28] sm:$0xff]
          %v461 = vld [vmem:[%s3 + $0x30] sm:$0xff]
          %v462 = vld [vmem:[%s3 + $0x38] sm:$0xff]
          %v463 = vld [vmem:[%s4] sm:$0x1]
          %v465 = vlaneseq
          %v466 = vshrl.u32 %v465, 7
          %v467 = vsub.s32 0, %v466
          %v468 = vrot.slane %v463, %v467
          %v471 = vsel %vm439, %v454, 0
          %473 = vmatprep.subr.mxu0 0.0
          %474 = vmatpush1.msra.mxu0 %v455
          %475 = vmatprep.subr.mxu0 0.0
          %476 = vmatpush1.msra.mxu0 %v456
          %477 = vmatprep.subr.mxu0 0.0
          %478 = vmatpush1.msra.mxu0 %v457
          %479 = vmatprep.subr.mxu0 0.0
          %480 = vmatpush1.msra.mxu0 %v458
          %481 = vmatprep.subr.mxu0 0.0
          %482 = vmatpush1.msra.mxu0 %v459
          %483 = vmatprep.subr.mxu0 0.0
          %484 = vmatpush1.msra.mxu0 %v460
          %485 = vmatprep.subr.mxu0 0.0
          %486 = vmatpush1.msra.mxu0 %v461
          %487 = vmatprep.subr.mxu0 0.0
          %488 = vmatpush1.msra.mxu0 %v462
          %489 = vmatprep.subr.mxu0 0.0
          %490 = vmatpush1.msra.mxu0 0.0
          %491 = vmatprep.subr.mxu0 0.0
          %492 = vmatpush1.msra.mxu0 0.0
          %493 = vmatprep.subr.mxu0 0.0
          %494 = vmatpush1.msra.mxu0 0.0
          %495 = vmatprep.subr.mxu0 0.0
          %496 = vmatpush1.msra.mxu0 0.0
          %497 = vmatprep.subr.mxu0 0.0
          %498 = vmatpush1.msra.mxu0 0.0
          %499 = vmatprep.subr.mxu0 0.0
          %500 = vmatpush1.msra.mxu0 0.0
          %501 = vmatprep.subr.mxu0 0.0
          %502 = vmatpush1.msra.mxu0 0.0
          %503 = vmatprep.subr.mxu0 0.0
          %504 = vmatpush1.msra.mxu0 0.0
          %505 = vmatprep.subr.mxu0 0.0
          %506 = vmatpush1.msra.mxu0 0.0
          %507 = vmatprep.subr.mxu0 0.0
          %508 = vmatpush1.msra.mxu0 0.0
          %509 = vmatprep.subr.mxu0 0.0
          %510 = vmatpush1.msra.mxu0 0.0
          %511 = vmatprep.subr.mxu0 0.0
          %512 = vmatpush1.msra.mxu0 0.0
          %513 = vmatprep.subr.mxu0 0.0
          %514 = vmatpush1.msra.mxu0 0.0
          %515 = vmatprep.subr.mxu0 0.0
          %516 = vmatpush1.msra.mxu0 0.0
          %517 = vmatprep.subr.mxu0 0.0
          %518 = vmatpush1.msra.mxu0 0.0
          %519 = vmatprep.subr.mxu0 0.0
          %520 = vmatpush1.msra.mxu0 0.0
          %521 = vmatprep.subr.mxu0 0.0
          %522 = vmatpush1.msra.mxu0 0.0
          %523 = vmatprep.subr.mxu0 0.0
          %524 = vmatpush1.msra.mxu0 0.0
          %525 = vmatprep.subr.mxu0 0.0
          %526 = vmatpush1.msra.mxu0 0.0
          %527 = vmatprep.subr.mxu0 0.0
          %528 = vmatpush1.msra.mxu0 0.0
          %529 = vmatprep.subr.mxu0 0.0
          %530 = vmatpush1.msra.mxu0 0.0
          %531 = vmatprep.subr.mxu0 0.0
          %532 = vmatpush1.msra.mxu0 0.0
          %533 = vmatprep.subr.mxu0 0.0
          %534 = vmatpush1.msra.mxu0 0.0
          %535 = vmatprep.subr.mxu0 0.0
          %536 = vmatpush1.msra.mxu0 0.0
          %537 = vmatprep.mubr.f32.mxu0 0.0
          %538 = vmatmul.mubr.f32.gmra.mrb[0].mxu0 %v471
          %v539 = vpop.f32.mrb[0].mxu0
          %v540 = vadd.f32 %v468, %v539
          %v541 = vpop.f32.mrb[0].mxu0
          %542 = vdwg.mxu0
          %vm543 = vcmask 130048
          %v544 = vsel %vm543, %v540, 0.0
          %v545 = vrot.slane %v544, 4
          %v546 = vadd.f32 %v544, %v545
          %v547 = vrot.slane %v546, 2
          %v548 = vadd.f32 %v546, %v547
          %v549 = vrot.slane %v548, 1
          %v550 = vadd.f32 %v548, %v549
          %v551 = vrcp.pop 8.0
          %v552 = vmul.f32 %v550, %v551
          %v553 = vsub.f32 %v540, %v552
          %v554 = vmul.f32 %v553, %v553
          %v555 = vsel %vm543, %v554, 0.0
          %v556 = vrot.slane %v555, 4
          %v557 = vadd.f32 %v555, %v556
          %v558 = vrot.slane %v557, 2
          %v559 = vadd.f32 %v557, %v558
          %v560 = vrot.slane %v559, 1
          %v561 = vadd.f32 %v559, %v560
          %v562 = vmul.f32 %v561, %v551
          %v563 = vadd.f32 %v562, 1e-05
          %v564 = vrsqrt.pop %v563
          %v565 = vmul.f32 %v553, %v564
          %v566 = vld [vmem:[%s7] sm:$0x1]
          %v568 = vlaneseq
          %v569 = vshrl.u32 %v568, 7
          %v570 = vsub.s32 0, %v569
          %v571 = vrot.slane %v566, %v570
          %v573 = vmul.f32 %v565, %v571
          %v574 = vld [vmem:[%s8] sm:$0x1]
          %v576 = vlaneseq
          %v577 = vshrl.u32 %v576, 7
          %v578 = vsub.s32 0, %v577
          %v579 = vrot.slane %v574, %v578
          %v581 = vadd.f32 %v573, %v579
          %v582 = vmax.f32 %v581, 0.0
          %v583 = vand.u32 2147483647, %v581
          %v584 = vsub.f32 0.0, %v583
          %v585 = vmul.f32 %v584, 1.442695
          %v586 = vpow.pop %v585
          %v587 = vadd.f32 %v586, 1.0
          %v588 = vlog2.pop %v587
          %v589 = vmul.f32 %v588, 0.6931472
          %v590 = vadd.f32 %v582, %v589
          %591 = vst.msk [vmem:[#allocation3] sm:$0xff] %vm543, %v590
          %v592 = vld [vmem:[%s5] sm:$0xff]
          %v593 = vld [vmem:[%s5 + $0x8] sm:$0xff]
          %v594 = vld [vmem:[%s5 + $0x10] sm:$0xff]
          %v595 = vld [vmem:[%s5 + $0x18] sm:$0xff]
          %v596 = vld [vmem:[%s5 + $0x20] sm:$0xff]
          %v597 = vld [vmem:[%s5 + $0x28] sm:$0xff]
          %v598 = vld [vmem:[%s5 + $0x30] sm:$0xff]
          %v599 = vld [vmem:[%s5 + $0x38] sm:$0xff]
          %v600 = vld [vmem:[%s6] sm:$0x1]
          %v602 = vlaneseq
          %v603 = vshrl.u32 %v602, 7
          %v604 = vsub.s32 0, %v603
          %v605 = vrot.slane %v600, %v604
          %607 = vmatprep.subr.mxu0 0.0
          %608 = vmatpush1.msra.mxu0 %v592
          %609 = vmatprep.subr.mxu0 0.0
          %610 = vmatpush1.msra.mxu0 %v593
          %611 = vmatprep.subr.mxu0 0.0
          %612 = vmatpush1.msra.mxu0 %v594
          %613 = vmatprep.subr.mxu0 0.0
          %614 = vmatpush1.msra.mxu0 %v595
          %615 = vmatprep.subr.mxu0 0.0
          %616 = vmatpush1.msra.mxu0 %v596
          %617 = vmatprep.subr.mxu0 0.0
          %618 = vmatpush1.msra.mxu0 %v597
          %619 = vmatprep.subr.mxu0 0.0
          %620 = vmatpush1.msra.mxu0 %v598
          %621 = vmatprep.subr.mxu0 0.0
          %622 = vmatpush1.msra.mxu0 %v599
          %623 = vmatprep.subr.mxu0 0.0
          %624 = vmatpush1.msra.mxu0 0.0
          %625 = vmatprep.subr.mxu0 0.0
          %626 = vmatpush1.msra.mxu0 0.0
          %627 = vmatprep.subr.mxu0 0.0
          %628 = vmatpush1.msra.mxu0 0.0
          %629 = vmatprep.subr.mxu0 0.0
          %630 = vmatpush1.msra.mxu0 0.0
          %631 = vmatprep.subr.mxu0 0.0
          %632 = vmatpush1.msra.mxu0 0.0
          %633 = vmatprep.subr.mxu0 0.0
          %634 = vmatpush1.msra.mxu0 0.0
          %635 = vmatprep.subr.mxu0 0.0
          %636 = vmatpush1.msra.mxu0 0.0
          %637 = vmatprep.subr.mxu0 0.0
          %638 = vmatpush1.msra.mxu0 0.0
          %639 = vmatprep.subr.mxu0 0.0
          %640 = vmatpush1.msra.mxu0 0.0
          %641 = vmatprep.subr.mxu0 0.0
          %642 = vmatpush1.msra.mxu0 0.0
          %643 = vmatprep.subr.mxu0 0.0
          %644 = vmatpush1.msra.mxu0 0.0
          %645 = vmatprep.subr.mxu0 0.0
          %646 = vmatpush1.msra.mxu0 0.0
          %647 = vmatprep.subr.mxu0 0.0
          %648 = vmatpush1.msra.mxu0 0.0
          %649 = vmatprep.subr.mxu0 0.0
          %650 = vmatpush1.msra.mxu0 0.0
          %651 = vmatprep.subr.mxu0 0.0
          %652 = vmatpush1.msra.mxu0 0.0
          %653 = vmatprep.subr.mxu0 0.0
          %654 = vmatpush1.msra.mxu0 0.0
          %655 = vmatprep.subr.mxu0 0.0
          %656 = vmatpush1.msra.mxu0 0.0
          %657 = vmatprep.subr.mxu0 0.0
          %658 = vmatpush1.msra.mxu0 0.0
          %659 = vmatprep.subr.mxu0 0.0
          %660 = vmatpush1.msra.mxu0 0.0
          %661 = vmatprep.subr.mxu0 0.0
          %662 = vmatpush1.msra.mxu0 0.0
          %663 = vmatprep.subr.mxu0 0.0
          %664 = vmatpush1.msra.mxu0 0.0
          %665 = vmatprep.subr.mxu0 0.0
          %666 = vmatpush1.msra.mxu0 0.0
          %667 = vmatprep.subr.mxu0 0.0
          %668 = vmatpush1.msra.mxu0 0.0
          %669 = vmatprep.subr.mxu0 0.0
          %670 = vmatpush1.msra.mxu0 0.0
          %671 = vmatprep.mubr.f32.mxu0 0.0
          %672 = vmatmul.mubr.f32.gmra.mrb[0].mxu0 %v471
          %v673 = vpop.f32.mrb[0].mxu0
          %v674 = vadd.f32 %v605, %v673
          %v675 = vpop.f32.mrb[0].mxu0
          %676 = vdwg.mxu0
          %v677 = vmax.f32 %v674, 0.0
          %v678 = vand.u32 2147483647, %v674
          %v679 = vsub.f32 0.0, %v678
          %v680 = vmul.f32 %v679, 1.442695
          %v681 = vpow.pop %v680
          %v682 = vadd.f32 %v681, 1.0
          %v683 = vlog2.pop %v682
          %v684 = vmul.f32 %v683, 0.6931472
          %v685 = vadd.f32 %v677, %v684
          %v686 = vadd.f32 %v685, 1.0
          %687 = vst.msk [vmem:[#allocation5] sm:$0xff] %vm543, %v686
        $region64: #{tpu_custom_call.1} parent=55 // pred_fallthru
          _
        // Predicated region
        $region65: #{tpu_custom_call.1} parent=55 // pred_check
          %p688 = pneg %p236
        $region66: #{tpu_custom_call.1} parent=55 // pred_check_branch
          %690 = sbr.rel (%p688) target = $region68
        $region67: #{tpu_custom_call.1} parent=55 // pred_region
          %s692 = ssub.s32 128, 128
          %693 = vsyncadd [#allocation4], %s692
          %s695 = sshll.u32 [#allocation3], 4
          %s696 = int_to_ptr.vmem [resolvable:$true] %s695
          %698 = dma.vmem_to_hbm [thread:$0]  %s696, 128, %s9, [#allocation4]
        $region68: #{tpu_custom_call.1} parent=55 // pred_fallthru
          _
        // Predicated region
        $region69: #{tpu_custom_call.1} parent=55 // pred_check
          %p699 = pneg %p257
        $region70: #{tpu_custom_call.1} parent=55 // pred_check_branch
          %701 = sbr.rel (%p699) target = $region72
        $region71: #{tpu_custom_call.1} parent=55 // pred_region
          %s703 = ssub.s32 128, 128
          %704 = vsyncadd [#allocation6], %s703
          %s706 = sshll.u32 [#allocation5], 4
          %s707 = int_to_ptr.vmem [resolvable:$true] %s706
          %709 = dma.vmem_to_hbm [thread:$0]  %s707, 128, %s10, [#allocation6]
        $region72: #{tpu_custom_call.1} parent=55 // pred_fallthru
          _
        // Predicated region
        $region73: #{tpu_custom_call.1} parent=55 // pred_check
          %p710 = pneg %p236
        $region74: #{tpu_custom_call.1} parent=55 // pred_check_branch
          %712 = sbr.rel (%p710) target = $region76
        $region75: #{tpu_custom_call.1} parent=55 // pred_region
          %713 = dma.done [#allocation4], 128
        $region76: #{tpu_custom_call.1} parent=55 // pred_fallthru
          _
        // Predicated region
        $region77: #{tpu_custom_call.1} parent=55 // pred_check
          %p714 = pneg %p257
        $region78: #{tpu_custom_call.1} parent=55 // pred_check_branch
          %716 = sbr.rel (%p714) target = $region80
        $region79: #{tpu_custom_call.1} parent=55 // pred_region
          %717 = dma.done [#allocation6], 128
        $region80: #{tpu_custom_call.1} parent=55 // pred_fallthru
          _
      $region56: #{tpu_custom_call.1} parent=5 // pred_fallthru
        _
      %p718 = scmp.le.s32.totalorder 2, %s19
      // Predicated region
      $region81: #{tpu_custom_call.1} parent=5 // pred_check
        %p719 = pneg %p718
      $region82: #{tpu_custom_call.1} parent=5 // pred_check_branch
        %721 = sbr.rel (%p719) target = $region84
      $region83: #{tpu_custom_call.1} parent=5 // pred_region
        %s722 = ssub.s32 %s19, 2
      $region84: #{tpu_custom_call.1} parent=5 // pred_fallthru
        _
    $region6: #{tpu_custom_call.1} parent=1 // loop_footer
      %s23 = sadd.s32 1, %s19
    $region7: #{tpu_custom_call.1} parent=1 // loop_footer_branch
      %18 = sbr.rel target = $region3
    $region8: #{tpu_custom_call.1} parent=1 // loop_exit
      _
    %723 = vsyncpa [#allocation4], 1
    %s724 = scalar_lea.sflag [#allocation4], 1
    %725 = vsyncpa %s724, 1
    %726 = vsyncpa [#allocation6], 1

</llo_original>
